<compile_context>
chip_gen: v7x
topology: tpu7x:2x2x1
jax: 0.10.0
libtpu: 0.0.40
codegen_flags: <defaults>
</compile_context>

<pallas_src>
import functools

import jax
import jax.numpy as jnp
from jax.experimental import pallas as pl
from jax.experimental.pallas import tpu as pltpu


# --------------------------------------------------------------------------
# Fused Pallas kernel: conv (as GEMM) + bias + ReLU + masked mean + head
# --------------------------------------------------------------------------
def _fused_conv_pool_head_kernel(x_ref, wk_ref, bk_ref, wct_ref, bc_ref,
                                 mask_ref, out_ref, *, taps, span, ls, bt):
    # x_ref   : (C, bt*Ls + TAIL)  bt flattened zero-padded images packed
    #                              along lanes (per-image stride Ls), bf16
    # wk_ref  : (hidden, 9*C)      conv weight, feature order (ki, kj, c), bf16
    # bk_ref  : (hidden, 1)        conv bias, f32
    # wct_ref : (num_cls, hidden)  classifier weight (transposed), f32
    # bc_ref  : (num_cls, 1)       classifier bias, f32
    # mask_ref: (1, Ls) f32        1/(H*W) at valid output lanes, 0 at the
    #                              per-row wrap-around / alignment-pad lanes
    # out_ref : (num_cls, bt)
    x = x_ref[...]                                        # (C, Wblk) bf16

    # In-VMEM im2col: each 3x3 tap is a lane-offset static slice of the
    # packed padded images.  Row order (ki, kj, c) matches wk's column order.
    cols = [x[:, s:s + span] for s in taps]               # 9 x (C, bt*Ls)
    patches_t = jnp.concatenate(cols, axis=0)             # (9*C, bt*Ls) bf16

    # 3x3 conv over all bt images as a single bf16 GEMM, f32 accumulation.
    feat_t = jnp.dot(wk_ref[...], patches_t,
                     preferred_element_type=jnp.float32)  # (hidden, bt*Ls)
    feat_t = jnp.maximum(feat_t + bk_ref[...], 0.0)       # bias + ReLU (f32)

    # Masked global average pool per image.  Per-image slices start at
    # multiples of Ls (a multiple of 128) -> lane-aligned, no relayout.
    mask = mask_ref[...]                                   # (1, Ls)
    pooled_cols = []
    for b in range(bt):
        chunk = feat_t[:, b * ls:(b + 1) * ls]             # (hidden, Ls)
        pooled_cols.append(jnp.sum(chunk * mask, axis=1, keepdims=True))
    pooled = jnp.concatenate(pooled_cols, axis=1)          # (hidden, bt) f32

    # Tiny classifier matmul on the pooled features.
    out_ref[...] = jnp.dot(wct_ref[...], pooled,
                           preferred_element_type=jnp.float32) + bc_ref[...]


# --------------------------------------------------------------------------
# SingleModal forward
# --------------------------------------------------------------------------
@functools.partial(jax.jit, static_argnums=(2, 3))
def single_modal_forward(x, params, input_shape, num_cls):
    h, w = input_shape
    n = x.shape[0]
    # reference: x = x.reshape(len(x), -1, input_shape[0], input_shape[1])
    x = x.reshape(n, -1, h, w)
    c_in = x.shape[1]

    w_conv = params["w_conv"].astype(jnp.float32)     # (hidden, c_in, 3, 3)
    b_conv = params["b_conv"].astype(jnp.float32)     # (hidden,)
    w_cls = params["w_cls"].astype(jnp.float32)       # (hidden, num_cls)
    b_cls = params["b_cls"].astype(jnp.float32)       # (num_cls,)
    hidden = w_conv.shape[0]

    hp, wp = h + 2, w + 2
    lp = hp * wp                                      # flattened padded image
    l_valid = (h - 1) * wp + w                        # last valid output + 1
    max_tap = 2 * wp + 2
    ls = ((lp + 127) // 128) * 128                    # per-image lane stride
    tail = 128                                        # >= max_tap, aligned
    taps = tuple(ki * wp + kj for ki in range(3) for kj in range(3))

    # Images per grid step (lane packing) and batch padding.
    bt = min(n, 8)
    n_blocks = -(-n // bt)
    n_pad = n_blocks * bt
    span = bt * ls
    w_blk = span + tail

    # SAME (pad=1) zero padding, flatten spatial, cast activations to bf16,
    # pack bt images along the lane axis with stride Ls, append tail zeros.
    xp = jnp.pad(x.astype(jnp.bfloat16),
                 ((0, n_pad - n), (0, 0), (1, 1), (1, 1)))   # (n_pad,C,hp,wp)
    xp = xp.reshape(n_pad, c_in, lp)
    xp = jnp.pad(xp, ((0, 0), (0, 0), (0, ls - lp)))         # (n_pad,C,Ls)
    xp = xp.reshape(n_blocks, bt, c_in, ls)
    xp = jnp.transpose(xp, (0, 2, 1, 3)).reshape(n_blocks, c_in, span)
    xp = jnp.pad(xp, ((0, 0), (0, 0), (0, tail)))            # (nb,C,Wblk)

    # Conv weight -> (hidden, 9*c_in) with feature order (ki, kj, c) to match
    # the in-kernel tap construction; bf16 for the MXU.
    wk = jnp.transpose(w_conv, (0, 2, 3, 1)).reshape(hidden, 9 * c_in)
    wk = wk.astype(jnp.bfloat16)
    bk = b_conv.reshape(hidden, 1)                    # f32
    wct = w_cls.T                                     # (num_cls, hidden) f32
    bc = b_cls.reshape(num_cls, 1)                    # f32

    # Pooling mask over one image's Ls lanes: 1/(H*W) at valid columns
    # (q < L_valid and q % Wp < W), 0 at wrap-around / alignment-pad lanes.
    q = jnp.arange(ls)
    pool_mask = ((q < l_valid) & ((q % wp) < w)).astype(jnp.float32)
    pool_mask = (pool_mask / float(h * w)).reshape(1, ls)

    kernel = functools.partial(_fused_conv_pool_head_kernel,
                               taps=taps, span=span, ls=ls, bt=bt)

    out = pl.pallas_call(
        kernel,
        out_shape=jax.ShapeDtypeStruct((n_blocks, num_cls, bt), jnp.float32),
        grid=(n_blocks,),
        in_specs=[
            # one packed block of bt images per grid step (auto double-buffer)
            pl.BlockSpec((None, c_in, w_blk), lambda i: (i, 0, 0)),
            # small weights / bias / mask stay resident in VMEM
            pl.BlockSpec((hidden, 9 * c_in), lambda i: (0, 0)),
            pl.BlockSpec((hidden, 1), lambda i: (0, 0)),
            pl.BlockSpec((num_cls, hidden), lambda i: (0, 0)),
            pl.BlockSpec((num_cls, 1), lambda i: (0, 0)),
            pl.BlockSpec((1, ls), lambda i: (0, 0)),
        ],
        out_specs=pl.BlockSpec((None, num_cls, bt), lambda i: (i, 0, 0)),
        compiler_params=pltpu.CompilerParams(
            dimension_semantics=("parallel",),   # megacore / v7x 2-TC sharding
        ),
    )(xp, wk, bk, wct, bc, pool_mask)

    # (n_blocks, num_cls, bt) -> (n_pad, num_cls) -> drop batch padding.
    out = jnp.transpose(out, (0, 2, 1)).reshape(n_pad, num_cls)
    return out[:n]


# --------------------------------------------------------------------------
# Pure-JAX reference (for a numerical sanity check only)
# --------------------------------------------------------------------------
def reference_forward(x, params, input_shape, num_cls):
    h, w = input_shape
    n = x.shape[0]
    xr = x.reshape(n, -1, h, w).astype(jnp.float32)
    y = jax.lax.conv_general_dilated(
        xr, params["w_conv"], window_strides=(1, 1), padding="SAME",
        dimension_numbers=("NCHW", "OIHW", "NCHW"))
    y = jnp.maximum(y + params["b_conv"][None, :, None, None], 0.0)
    pooled = jnp.mean(y, axis=(2, 3))
    return pooled @ params["w_cls"] + params["b_cls"][None, :]


def make_params(key, c_in, hidden, num_cls):
    k1, k2, k3, k4 = jax.random.split(key, 4)
    return {
        "w_conv": 0.1 * jax.random.normal(k1, (hidden, c_in, 3, 3), jnp.float32),
        "b_conv": 0.1 * jax.random.normal(k2, (hidden,), jnp.float32),
        "w_cls":  0.1 * jax.random.normal(k3, (hidden, num_cls), jnp.float32),
        "b_cls":  0.1 * jax.random.normal(k4, (num_cls,), jnp.float32),
    }


if __name__ == "__main__":
    batch, in_ch, T, c = 2, 2, 16, 16          # module docstring: (bs, 2, T, c)
    input_shape = (16, 16)                     # (H, W) after reshape
    hidden, num_cls = 32, 8

    key = jax.random.PRNGKey(0)
    kx, kp = jax.random.split(key)
    x = jax.random.normal(kx, (batch, in_ch, T, c), jnp.float32)
    params = make_params(kp, in_ch, hidden, num_cls)

    out = single_modal_forward(x, params, input_shape, num_cls)
    out = jax.block_until_ready(out)
    assert out.shape == (batch, num_cls), out.shape

    ref = jax.block_until_ready(
        reference_forward(x, params, input_shape, num_cls))
    assert jnp.allclose(out, ref, rtol=3e-2, atol=3e-2), (out, ref)
    print("KERNEL_OK")
</pallas_src>

<mosaic_0001>
module attributes {stable_mosaic.version = 11 : i64} {
  func.func @_fused_conv_pool_head_kernel(%arg0: i32, %arg1: memref<1x2x896xbf16, #tpu.memory_space<vmem>>, %arg2: memref<32x18xbf16, #tpu.memory_space<vmem>>, %arg3: memref<32x1xf32, #tpu.memory_space<vmem>>, %arg4: memref<8x32xf32, #tpu.memory_space<vmem>>, %arg5: memref<8x1xf32, #tpu.memory_space<vmem>>, %arg6: memref<1x384xf32, #tpu.memory_space<vmem>>, %arg7: memref<1x8x2xf32, #tpu.memory_space<vmem>>) attributes {dimension_semantics = [#tpu.dimension_semantics<parallel>], iteration_bounds = array<i64: 1>, scalar_prefetch = 0 : i64, scratch_operands = 0 : i64, tpu.core_type = #tpu.core_type<tc>, window_params = [{transform_indices = @transform_0, window_bounds = array<i64: 1, 2, 896>}, {pipeline_mode = #tpu.pipeline_mode<synchronous>, transform_indices = @transform_1, window_bounds = array<i64: 32, 18>}, {pipeline_mode = #tpu.pipeline_mode<synchronous>, transform_indices = @transform_2, window_bounds = array<i64: 32, 1>}, {pipeline_mode = #tpu.pipeline_mode<synchronous>, transform_indices = @transform_3, window_bounds = array<i64: 8, 32>}, {pipeline_mode = #tpu.pipeline_mode<synchronous>, transform_indices = @transform_4, window_bounds = array<i64: 8, 1>}, {pipeline_mode = #tpu.pipeline_mode<synchronous>, transform_indices = @transform_5, window_bounds = array<i64: 1, 384>}, {transform_indices = @transform_6, window_bounds = array<i64: 1, 8, 2>}]} {
    %c0 = arith.constant 0 : index
    %c0_0 = arith.constant 0 : index
    %c0_1 = arith.constant 0 : index
    %0 = vector.load %arg1[%c0, %c0_0, %c0_1] : memref<1x2x896xbf16, #tpu.memory_space<vmem>>, vector<1x2x896xbf16>
    %1 = vector.shape_cast %0 : vector<1x2x896xbf16> to vector<2x896xbf16>
    %2 = vector.extract_strided_slice %1 {offsets = [0, 0], sizes = [2, 768], strides = [1, 1]} : vector<2x896xbf16> to vector<2x768xbf16>
    %3 = vector.extract_strided_slice %1 {offsets = [0, 1], sizes = [2, 768], strides = [1, 1]} : vector<2x896xbf16> to vector<2x768xbf16>
    %4 = vector.extract_strided_slice %1 {offsets = [0, 2], sizes = [2, 768], strides = [1, 1]} : vector<2x896xbf16> to vector<2x768xbf16>
    %5 = vector.extract_strided_slice %1 {offsets = [0, 18], sizes = [2, 768], strides = [1, 1]} : vector<2x896xbf16> to vector<2x768xbf16>
    %6 = vector.extract_strided_slice %1 {offsets = [0, 19], sizes = [2, 768], strides = [1, 1]} : vector<2x896xbf16> to vector<2x768xbf16>
    %7 = vector.extract_strided_slice %1 {offsets = [0, 20], sizes = [2, 768], strides = [1, 1]} : vector<2x896xbf16> to vector<2x768xbf16>
    %8 = vector.extract_strided_slice %1 {offsets = [0, 36], sizes = [2, 768], strides = [1, 1]} : vector<2x896xbf16> to vector<2x768xbf16>
    %9 = vector.extract_strided_slice %1 {offsets = [0, 37], sizes = [2, 768], strides = [1, 1]} : vector<2x896xbf16> to vector<2x768xbf16>
    %10 = vector.extract_strided_slice %1 {offsets = [0, 38], sizes = [2, 768], strides = [1, 1]} : vector<2x896xbf16> to vector<2x768xbf16>
    %11 = tpu.concatenate %2, %3, %4, %5, %6, %7, %8, %9, %10 in 0 : vector<2x768xbf16>, vector<2x768xbf16>, vector<2x768xbf16>, vector<2x768xbf16>, vector<2x768xbf16>, vector<2x768xbf16>, vector<2x768xbf16>, vector<2x768xbf16>, vector<2x768xbf16> -> vector<18x768xbf16>
    %c0_2 = arith.constant 0 : index
    %c0_3 = arith.constant 0 : index
    %12 = vector.load %arg2[%c0_2, %c0_3] : memref<32x18xbf16, #tpu.memory_space<vmem>>, vector<32x18xbf16>
    %cst = arith.constant dense<0.000000e+00> : vector<32x768xf32>
    %13 = tpu.matmul %12, %11, %cst {dimension_numbers = #tpu.dot_dimension_numbers<[1], [0], [0], [1], [0, 0, 1, 1], [], []>} : vector<32x18xbf16>, vector<18x768xbf16>, vector<32x768xf32> -> vector<32x768xf32>
    %c0_4 = arith.constant 0 : index
    %c0_5 = arith.constant 0 : index
    %14 = vector.load %arg3[%c0_4, %c0_5] : memref<32x1xf32, #tpu.memory_space<vmem>>, vector<32x1xf32>
    %15 = vector.broadcast %14 : vector<32x1xf32> to vector<32x768xf32>
    %16 = arith.addf %13, %15 : vector<32x768xf32>
    %cst_6 = arith.constant 0.000000e+00 : f32
    %17 = vector.broadcast %cst_6 : f32 to vector<32x768xf32>
    %18 = arith.maximumf %16, %17 : vector<32x768xf32>
    %c0_7 = arith.constant 0 : index
    %c0_8 = arith.constant 0 : index
    %19 = vector.load %arg6[%c0_7, %c0_8] : memref<1x384xf32, #tpu.memory_space<vmem>>, vector<1x384xf32>
    %20 = vector.extract_strided_slice %18 {offsets = [0, 0], sizes = [32, 384], strides = [1, 1]} : vector<32x768xf32> to vector<32x384xf32>
    %21 = vector.broadcast %19 : vector<1x384xf32> to vector<32x384xf32>
    %22 = arith.mulf %20, %21 : vector<32x384xf32>
    %cst_9 = arith.constant dense<0.000000e+00> : vector<32xf32>
    %23 = vector.multi_reduction <add>, %22, %cst_9 [1] : vector<32x384xf32> to vector<32xf32>
    %24 = vector.shape_cast %23 : vector<32xf32> to vector<32x1xf32>
    %25 = vector.extract_strided_slice %18 {offsets = [0, 384], sizes = [32, 384], strides = [1, 1]} : vector<32x768xf32> to vector<32x384xf32>
    %26 = vector.broadcast %19 : vector<1x384xf32> to vector<32x384xf32>
    %27 = arith.mulf %25, %26 : vector<32x384xf32>
    %cst_10 = arith.constant dense<0.000000e+00> : vector<32xf32>
    %28 = vector.multi_reduction <add>, %27, %cst_10 [1] : vector<32x384xf32> to vector<32xf32>
    %29 = vector.shape_cast %28 : vector<32xf32> to vector<32x1xf32>
    %30 = tpu.concatenate %24, %29 in 1 : vector<32x1xf32>, vector<32x1xf32> -> vector<32x2xf32>
    %c0_11 = arith.constant 0 : index
    %c0_12 = arith.constant 0 : index
    %31 = vector.load %arg4[%c0_11, %c0_12] : memref<8x32xf32, #tpu.memory_space<vmem>>, vector<8x32xf32>
    %cst_13 = arith.constant dense<0.000000e+00> : vector<8x2xf32>
    %32 = tpu.matmul %31, %30, %cst_13 {dimension_numbers = #tpu.dot_dimension_numbers<[1], [0], [0], [1], [0, 0, 1, 1], [], []>} : vector<8x32xf32>, vector<32x2xf32>, vector<8x2xf32> -> vector<8x2xf32>
    %c0_14 = arith.constant 0 : index
    %c0_15 = arith.constant 0 : index
    %33 = vector.load %arg5[%c0_14, %c0_15] : memref<8x1xf32, #tpu.memory_space<vmem>>, vector<8x1xf32>
    %34 = vector.broadcast %33 : vector<8x1xf32> to vector<8x2xf32>
    %35 = arith.addf %32, %34 : vector<8x2xf32>
    %c0_16 = arith.constant 0 : index
    %c0_17 = arith.constant 0 : index
    %c0_18 = arith.constant 0 : index
    %36 = vector.load %arg7[%c0_16, %c0_17, %c0_18] : memref<1x8x2xf32, #tpu.memory_space<vmem>>, vector<1x8x2xf32>
    %37 = vector.shape_cast %36 : vector<1x8x2xf32> to vector<8x2xf32>
    %38 = vector.shape_cast %35 : vector<8x2xf32> to vector<1x8x2xf32>
    tpu.vector_store %arg7[%c0_16, %c0_17, %c0_18], %38 {strides = array<i32>} : memref<1x8x2xf32, #tpu.memory_space<vmem>>, vector<1x8x2xf32>,
    return
  }
  func.func @transform_0(%arg0: i32) -> (i32, i32, i32) {
    %c0_i32 = arith.constant 0 : i32
    %c0_i32_0 = arith.constant 0 : i32
    %c0_i32_1 = arith.constant 0 : i32
    return %arg0, %c0_i32, %c0_i32_0 : i32, i32, i32
  }
  func.func @transform_1(%arg0: i32) -> (i32, i32) {
    %c0_i32 = arith.constant 0 : i32
    %c0_i32_0 = arith.constant 0 : i32
    %c0_i32_1 = arith.constant 0 : i32
    return %c0_i32, %c0_i32_0 : i32, i32
  }
  func.func @transform_2(%arg0: i32) -> (i32, i32) {
    %c0_i32 = arith.constant 0 : i32
    %c0_i32_0 = arith.constant 0 : i32
    %c0_i32_1 = arith.constant 0 : i32
    return %c0_i32, %c0_i32_0 : i32, i32
  }
  func.func @transform_3(%arg0: i32) -> (i32, i32) {
    %c0_i32 = arith.constant 0 : i32
    %c0_i32_0 = arith.constant 0 : i32
    %c0_i32_1 = arith.constant 0 : i32
    return %c0_i32, %c0_i32_0 : i32, i32
  }
  func.func @transform_4(%arg0: i32) -> (i32, i32) {
    %c0_i32 = arith.constant 0 : i32
    %c0_i32_0 = arith.constant 0 : i32
    %c0_i32_1 = arith.constant 0 : i32
    return %c0_i32, %c0_i32_0 : i32, i32
  }
  func.func @transform_5(%arg0: i32) -> (i32, i32) {
    %c0_i32 = arith.constant 0 : i32
    %c0_i32_0 = arith.constant 0 : i32
    %c0_i32_1 = arith.constant 0 : i32
    return %c0_i32, %c0_i32_0 : i32, i32
  }
  func.func @transform_6(%arg0: i32) -> (i32, i32, i32) {
    %c0_i32 = arith.constant 0 : i32
    %c0_i32_0 = arith.constant 0 : i32
    %c0_i32_1 = arith.constant 0 : i32
    return %arg0, %c0_i32, %c0_i32_0 : i32, i32, i32
  }
}

</mosaic_0001>

<llo_original>
// kernel: single_modal_forward.1
$region0: #{single_modal_forward.1}
  #allocation0 [shape = 'u32[]', space=smem, size = 0x4, offset = 0x4, fixed_abs, tag = 'smem constant byte address 0x4 - core index']
  #allocation1 [shape = 'u32[144,128]{1,0:T(1,128)}', space=vmem, size = 0x12000, scoped, tag = 'internal scratch']
  %s0 = inlined_call_operand.vmem [shape: bf16[1,2,896], index: 0, kind: input, shape index: {}]
  %s1 = inlined_call_operand.vmem [shape: bf16[32,18], index: 1, kind: input, shape index: {}]
  %s2 = inlined_call_operand.vmem [shape: f32[32,1], index: 2, kind: input, shape index: {}]
  %s3 = inlined_call_operand.vmem [shape: f32[8,32], index: 3, kind: input, shape index: {}]
  %s4 = inlined_call_operand.vmem [shape: f32[8,1], index: 4, kind: input, shape index: {}]
  %s5 = inlined_call_operand.vmem [shape: f32[1,384], index: 5, kind: input, shape index: {}]
  %s6 = inlined_call_operand.vmem [shape: f32[1,8,2], index: 6, kind: output, shape index: {}]
  %s7 = sld [smem:[#allocation0]]
  $region34: #{single_modal_forward.1} parent=0
    _
  %s9 = ssub.s32 1, %s7
  %s10 = scalar_select 0, %s9, %s7
  // Predicated region
  $region2: #{single_modal_forward.1} parent=0 // pred_check
    _
  $region3: #{single_modal_forward.1} parent=0 // pred_check_branch
    %12 = sbr.rel (0) target = $region5
  $region4: #{single_modal_forward.1} parent=0 // pred_region
    _
  $region5: #{single_modal_forward.1} parent=0 // pred_fallthru
    _
  // Predicated region
  $region6: #{single_modal_forward.1} parent=0 // pred_check
    _
  $region7: #{single_modal_forward.1} parent=0 // pred_check_branch
    %14 = sbr.rel (0) target = $region9
  $region8: #{single_modal_forward.1} parent=0 // pred_region
    _
  $region9: #{single_modal_forward.1} parent=0 // pred_fallthru
    _
  // Predicated region
  $region10: #{single_modal_forward.1} parent=0 // pred_check
    _
  $region11: #{single_modal_forward.1} parent=0 // pred_check_branch
    %16 = sbr.rel (0) target = $region13
  $region12: #{single_modal_forward.1} parent=0 // pred_region
    _
  $region13: #{single_modal_forward.1} parent=0 // pred_fallthru
    _
  // Predicated region
  $region14: #{single_modal_forward.1} parent=0 // pred_check
    _
  $region15: #{single_modal_forward.1} parent=0 // pred_check_branch
    %18 = sbr.rel (0) target = $region17
  $region16: #{single_modal_forward.1} parent=0 // pred_region
    _
  $region17: #{single_modal_forward.1} parent=0 // pred_fallthru
    _
  // Predicated region
  $region18: #{single_modal_forward.1} parent=0 // pred_check
    _
  $region19: #{single_modal_forward.1} parent=0 // pred_check_branch
    %20 = sbr.rel (0) target = $region21
  $region20: #{single_modal_forward.1} parent=0 // pred_region
    _
  $region21: #{single_modal_forward.1} parent=0 // pred_fallthru
    _
  // Predicated region
  $region22: #{single_modal_forward.1} parent=0 // pred_check
    _
  $region23: #{single_modal_forward.1} parent=0 // pred_check_branch
    %22 = sbr.rel (0) target = $region25
  $region24: #{single_modal_forward.1} parent=0 // pred_region
    _
  $region25: #{single_modal_forward.1} parent=0 // pred_fallthru
    _
  %v24 = vld [vmem:[%s0] sm:$0x7f]
  %v26 = vcombine.high %v24, %v24
  %v28 = vunpack.c.l.s4 1966171168
  %v29 = vunpack.c.0.s8 %v28
  %v30 = vlaneseq
  %v31 = vshrl.u32 %v30, 7
  %v32 = vsub.s32 %v29, %v31
  %v33 = vrot.slane %v24, %v32
  %v35 = vunpack.c.l.s4 1966171168
  %v36 = vunpack.c.0.s8 %v35
  %v37 = vlaneseq
  %v38 = vshrl.u32 %v37, 7
  %v39 = vsub.s32 %v36, %v38
  %v40 = vrot.slane %v26, %v39
  %v41 = vcombine.high %v33, %v33
  %v42 = vcombine.high %v40, %v40
  %v44 = vunpack.c.l.s4 1966171168
  %v45 = vunpack.c.0.s8 %v44
  %v46 = vlaneseq
  %v47 = vshrl.u32 %v46, 7
  %v48 = vsub.s32 %v45, %v47
  %v49 = vrot.slane %v33, %v48
  %v51 = vunpack.c.l.s4 1966171168
  %v52 = vunpack.c.0.s8 %v51
  %v53 = vlaneseq
  %v54 = vshrl.u32 %v53, 7
  %v55 = vsub.s32 %v52, %v54
  %v56 = vrot.slane %v40, %v55
  %v58 = vunpack.c.l.s4 1966171168
  %v59 = vunpack.c.0.s8 %v58
  %v60 = vlaneseq
  %v61 = vshrl.u32 %v60, 7
  %v62 = vsub.s32 %v59, %v61
  %v63 = vrot.slane %v41, %v62
  %v65 = vunpack.c.l.s4 1966171168
  %v66 = vunpack.c.0.s8 %v65
  %v67 = vlaneseq
  %v68 = vshrl.u32 %v67, 7
  %v69 = vsub.s32 %v66, %v68
  %v70 = vrot.slane %v42, %v69
  %v71 = vcombine.high %v49, %v49
  %v72 = vcombine.high %v63, %v63
  %v73 = vcombine.low %v24, %v24
  %v75 = vunpack.c.l.s4 1966171168
  %v76 = vunpack.c.0.s8 %v75
  %v77 = vlaneseq
  %v78 = vshrl.u32 %v77, 7
  %v79 = vsub.s32 %v76, %v78
  %v80 = vrot.slane %v73, %v79
  %v81 = vcombine.high %v80, %v80
  %v83 = vunpack.c.l.s4 1966171168
  %v84 = vunpack.c.0.s8 %v83
  %v85 = vlaneseq
  %v86 = vshrl.u32 %v85, 7
  %v87 = vsub.s32 %v84, %v86
  %v88 = vrot.slane %v80, %v87
  %v90 = vunpack.c.l.s4 1966171168
  %v91 = vunpack.c.0.s8 %v90
  %v92 = vlaneseq
  %v93 = vshrl.u32 %v92, 7
  %v94 = vsub.s32 %v91, %v93
  %v95 = vrot.slane %v81, %v94
  %v96 = vcombine.high %v88, %v88
  %v97 = vcombine.high %v95, %v95
  %98 = vrot.lane.b32.xlu0 %v88, 127
  %v99 = vpop.permute.xlu0 %98
  %100 = vrot.lane.b32.xlu0 %v95, 127
  %v101 = vpop.permute.xlu0 %100
  %102 = vrot.lane.b32.xlu0 %v96, 127
  %v103 = vpop.permute.xlu0 %102
  %104 = vrot.lane.b32.xlu0 %v97, 127
  %v105 = vpop.permute.xlu0 %104
  %106 = vrot.lane.b32.xlu0 %v49, 127
  %v107 = vpop.permute.xlu0 %106
  %108 = vrot.lane.b32.xlu0 %v63, 127
  %v109 = vpop.permute.xlu0 %108
  %110 = vrot.lane.b32.xlu0 %v71, 127
  %v111 = vpop.permute.xlu0 %110
  %vm112 = vcmask 1039360
  %v113 = vsel %vm112, %v99, %v101
  %v114 = vsel %vm112, %v101, %v103
  %v115 = vsel %vm112, %v103, %v105
  %v116 = vsel %vm112, %v105, %v107
  %v117 = vsel %vm112, %v107, %v109
  %v118 = vsel %vm112, %v109, %v111
  %v119 = vcombine.low %v33, %v33
  %v120 = vcombine.low %v40, %v40
  %v122 = vunpack.c.l.s4 1966171168
  %v123 = vunpack.c.0.s8 %v122
  %v124 = vlaneseq
  %v125 = vshrl.u32 %v124, 7
  %v126 = vsub.s32 %v123, %v125
  %v127 = vrot.slane %v119, %v126
  %v129 = vunpack.c.l.s4 1966171168
  %v130 = vunpack.c.0.s8 %v129
  %v131 = vlaneseq
  %v132 = vshrl.u32 %v131, 7
  %v133 = vsub.s32 %v130, %v132
  %v134 = vrot.slane %v120, %v133
  %v135 = vcombine.high %v127, %v127
  %v136 = vcombine.high %v134, %v134
  %137 = vrot.lane.b32.xlu0 %v127, 126
  %v138 = vpop.permute.xlu0 %137
  %139 = vrot.lane.b32.xlu0 %v49, 126
  %v140 = vpop.permute.xlu0 %139
  %141 = vrot.lane.b32.xlu0 %v135, 126
  %v142 = vpop.permute.xlu0 %141
  %143 = vrot.lane.b32.xlu0 %v71, 126
  %v144 = vpop.permute.xlu0 %143
  %145 = vrot.lane.b32.xlu0 %v134, 126
  %v146 = vpop.permute.xlu0 %145
  %147 = vrot.lane.b32.xlu0 %v56, 126
  %v148 = vpop.permute.xlu0 %147
  %149 = vrot.lane.b32.xlu0 %v136, 126
  %v150 = vpop.permute.xlu0 %149
  %vm151 = vcmask 1031168
  %v152 = vsel %vm151, %v138, %v140
  %v153 = vsel %vm151, %v140, %v142
  %v154 = vsel %vm151, %v142, %v144
  %v155 = vsel %vm151, %v144, %v146
  %v156 = vsel %vm151, %v146, %v148
  %v157 = vsel %vm151, %v148, %v150
  %v158 = vcombine.low %v80, %v80
  %v160 = vunpack.c.l.s4 1966171168
  %v161 = vunpack.c.0.s8 %v160
  %v162 = vlaneseq
  %v163 = vshrl.u32 %v162, 7
  %v164 = vsub.s32 %v161, %v163
  %v165 = vrot.slane %v158, %v164
  %v166 = vcombine.high %v165, %v165
  %167 = vrot.lane.b32.xlu0 %v165, 110
  %v168 = vpop.permute.xlu0 %167
  %169 = vrot.lane.b32.xlu0 %v88, 110
  %v170 = vpop.permute.xlu0 %169
  %171 = vrot.lane.b32.xlu0 %v166, 110
  %v172 = vpop.permute.xlu0 %171
  %173 = vrot.lane.b32.xlu0 %v96, 110
  %v174 = vpop.permute.xlu0 %173
  %175 = vrot.lane.b32.xlu0 %v127, 110
  %v176 = vpop.permute.xlu0 %175
  %177 = vrot.lane.b32.xlu0 %v49, 110
  %v178 = vpop.permute.xlu0 %177
  %179 = vrot.lane.b32.xlu0 %v135, 110
  %v180 = vpop.permute.xlu0 %179
  %vm181 = vcmask 900096
  %v182 = vsel %vm181, %v168, %v170
  %v183 = vsel %vm181, %v170, %v172
  %v184 = vsel %vm181, %v172, %v174
  %v185 = vsel %vm181, %v174, %v176
  %v186 = vsel %vm181, %v176, %v178
  %v187 = vsel %vm181, %v178, %v180
  %v188 = vcombine.low %v49, %v49
  %v189 = vcombine.low %v56, %v56
  %v190 = vcombine.low %v63, %v63
  %v191 = vcombine.low %v70, %v70
  %192 = vrot.lane.b32.xlu0 %v188, 109
  %v193 = vpop.permute.xlu0 %192
  %194 = vrot.lane.b32.xlu0 %v190, 109
  %v195 = vpop.permute.xlu0 %194
  %196 = vrot.lane.b32.xlu0 %v49, 109
  %v197 = vpop.permute.xlu0 %196
  %198 = vrot.lane.b32.xlu0 %v63, 109
  %v199 = vpop.permute.xlu0 %198
  %200 = vrot.lane.b32.xlu0 %v189, 109
  %v201 = vpop.permute.xlu0 %200
  %202 = vrot.lane.b32.xlu0 %v191, 109
  %v203 = vpop.permute.xlu0 %202
  %204 = vrot.lane.b32.xlu0 %v56, 109
  %v205 = vpop.permute.xlu0 %204
  %vm206 = vcmask 891904
  %v207 = vsel %vm206, %v193, %v195
  %v208 = vsel %vm206, %v195, %v197
  %v209 = vsel %vm206, %v197, %v199
  %v210 = vsel %vm206, %v199, %v201
  %v211 = vsel %vm206, %v201, %v203
  %v212 = vsel %vm206, %v203, %v205
  %v213 = vcombine.low %v88, %v88
  %v214 = vcombine.low %v95, %v95
  %215 = vrot.lane.b32.xlu0 %v213, 108
  %v216 = vpop.permute.xlu0 %215
  %217 = vrot.lane.b32.xlu0 %v214, 108
  %v218 = vpop.permute.xlu0 %217
  %219 = vrot.lane.b32.xlu0 %v88, 108
  %v220 = vpop.permute.xlu0 %219
  %221 = vrot.lane.b32.xlu0 %v95, 108
  %v222 = vpop.permute.xlu0 %221
  %223 = vrot.lane.b32.xlu0 %v188, 108
  %v224 = vpop.permute.xlu0 %223
  %225 = vrot.lane.b32.xlu0 %v190, 108
  %v226 = vpop.permute.xlu0 %225
  %227 = vrot.lane.b32.xlu0 %v49, 108
  %v228 = vpop.permute.xlu0 %227
  %vm229 = vcmask 883712
  %v230 = vsel %vm229, %v216, %v218
  %v231 = vsel %vm229, %v218, %v220
  %v232 = vsel %vm229, %v220, %v222
  %v233 = vsel %vm229, %v222, %v224
  %v234 = vsel %vm229, %v224, %v226
  %v235 = vsel %vm229, %v226, %v228
  %v236 = vcombine.low %v127, %v127
  %v237 = vcombine.low %v134, %v134
  %238 = vrot.lane.b32.xlu0 %v236, 92
  %v239 = vpop.permute.xlu0 %238
  %240 = vrot.lane.b32.xlu0 %v188, 92
  %v241 = vpop.permute.xlu0 %240
  %242 = vrot.lane.b32.xlu0 %v127, 92
  %v243 = vpop.permute.xlu0 %242
  %244 = vrot.lane.b32.xlu0 %v49, 92
  %v245 = vpop.permute.xlu0 %244
  %246 = vrot.lane.b32.xlu0 %v237, 92
  %v247 = vpop.permute.xlu0 %246
  %248 = vrot.lane.b32.xlu0 %v189, 92
  %v249 = vpop.permute.xlu0 %248
  %250 = vrot.lane.b32.xlu0 %v134, 92
  %v251 = vpop.permute.xlu0 %250
  %vm252 = vcmask 752640
  %v253 = vsel %vm252, %v239, %v241
  %v254 = vsel %vm252, %v241, %v243
  %v255 = vsel %vm252, %v243, %v245
  %v256 = vsel %vm252, %v245, %v247
  %v257 = vsel %vm252, %v247, %v249
  %v258 = vsel %vm252, %v249, %v251
  %v259 = vcombine.low %v165, %v165
  %260 = vrot.lane.b32.xlu0 %v259, 91
  %v261 = vpop.permute.xlu0 %260
  %262 = vrot.lane.b32.xlu0 %v213, 91
  %v263 = vpop.permute.xlu0 %262
  %264 = vrot.lane.b32.xlu0 %v165, 91
  %v265 = vpop.permute.xlu0 %264
  %266 = vrot.lane.b32.xlu0 %v88, 91
  %v267 = vpop.permute.xlu0 %266
  %268 = vrot.lane.b32.xlu0 %v236, 91
  %v269 = vpop.permute.xlu0 %268
  %270 = vrot.lane.b32.xlu0 %v188, 91
  %v271 = vpop.permute.xlu0 %270
  %272 = vrot.lane.b32.xlu0 %v127, 91
  %v273 = vpop.permute.xlu0 %272
  %vm274 = vcmask 744448
  %v275 = vsel %vm274, %v261, %v263
  %v276 = vsel %vm274, %v263, %v265
  %v277 = vsel %vm274, %v265, %v267
  %v278 = vsel %vm274, %v267, %v269
  %v279 = vsel %vm274, %v269, %v271
  %v280 = vsel %vm274, %v271, %v273
  %v281 = vcombine.high %v56, %v56
  %282 = vrot.lane.b32.xlu0 %v49, 90
  %v283 = vpop.permute.xlu0 %282
  %284 = vrot.lane.b32.xlu0 %v63, 90
  %v285 = vpop.permute.xlu0 %284
  %286 = vrot.lane.b32.xlu0 %v71, 90
  %v287 = vpop.permute.xlu0 %286
  %288 = vrot.lane.b32.xlu0 %v72, 90
  %v289 = vpop.permute.xlu0 %288
  %290 = vrot.lane.b32.xlu0 %v56, 90
  %v291 = vpop.permute.xlu0 %290
  %292 = vrot.lane.b32.xlu0 %v70, 90
  %v293 = vpop.permute.xlu0 %292
  %294 = vrot.lane.b32.xlu0 %v281, 90
  %v295 = vpop.permute.xlu0 %294
  %vm296 = vcmask 736256
  %v297 = vsel %vm296, %v283, %v285
  %v298 = vsel %vm296, %v285, %v287
  %v299 = vsel %vm296, %v287, %v289
  %v300 = vsel %vm296, %v289, %v291
  %v301 = vsel %vm296, %v291, %v293
  %v302 = vsel %vm296, %v293, %v295
  %vm303 = vcmask 1040384
  %v306 = vsel %vm303, %v49, %v113
  %v309 = vsel %vm303, %v63, %v114
  %v312 = vsel %vm303, %v71, %v115
  %v315 = vsel %vm303, %v72, %v116
  %v318 = vsel %vm303, %v56, %v117
  %v321 = vsel %vm303, %v70, %v118
  %vm322 = vcmask 1041408
  %v324 = vsel %vm322, %v306, %v152
  %v326 = vsel %vm322, %v309, %v153
  %v328 = vsel %vm322, %v312, %v154
  %v330 = vsel %vm322, %v315, %v155
  %v332 = vsel %vm322, %v318, %v156
  %v334 = vsel %vm322, %v321, %v157
  %vm335 = vcmask 1042432
  %v337 = vsel %vm335, %v324, %v182
  %v339 = vsel %vm335, %v326, %v183
  %v341 = vsel %vm335, %v328, %v184
  %v343 = vsel %vm335, %v330, %v185
  %v345 = vsel %vm335, %v332, %v186
  %v347 = vsel %vm335, %v334, %v187
  %vm348 = vcmask 1043456
  %v350 = vsel %vm348, %v337, %v207
  %v352 = vsel %vm348, %v339, %v208
  %v354 = vsel %vm348, %v341, %v209
  %v356 = vsel %vm348, %v343, %v210
  %v358 = vsel %vm348, %v345, %v211
  %v360 = vsel %vm348, %v347, %v212
  %vm361 = vcmask 1044480
  %v363 = vsel %vm361, %v350, %v230
  %v365 = vsel %vm361, %v352, %v231
  %v367 = vsel %vm361, %v354, %v232
  %v369 = vsel %vm361, %v356, %v233
  %v371 = vsel %vm361, %v358, %v234
  %v373 = vsel %vm361, %v360, %v235
  %vm374 = vcmask 1045504
  %v376 = vsel %vm374, %v363, %v253
  %v378 = vsel %vm374, %v365, %v254
  %v380 = vsel %vm374, %v367, %v255
  %v382 = vsel %vm374, %v369, %v256
  %v384 = vsel %vm374, %v371, %v257
  %v386 = vsel %vm374, %v373, %v258
  %vm387 = vcmask 1046528
  %v389 = vsel %vm387, %v376, %v275
  %v392 = vsel %vm387, %v378, %v276
  %v395 = vsel %vm387, %v380, %v277
  %v398 = vsel %vm387, %v382, %v278
  %v401 = vsel %vm387, %v384, %v279
  %v404 = vsel %vm387, %v386, %v280
  %v406 = vld [vmem:[%s1] sm:$0xf]
  %v407 = vld [vmem:[%s1 + $0x4] sm:$0xf]
  %v408 = vld [vmem:[%s1 + $0x8] sm:$0xf]
  %v409 = vld [vmem:[%s1 + $0xc] sm:$0xf]
  %v410 = vld [vmem:[%s2] sm:$0xff]
  %v411 = vld [vmem:[%s2 + $0x8] sm:$0xff]
  %v412 = vld [vmem:[%s2 + $0x10] sm:$0xff]
  %v413 = vld [vmem:[%s2 + $0x18] sm:$0xff]
  %415 = vset.pattern.permute.xlu0 0
  %416 = vperm.xlu0 %415, %v410
  %v417 = vpop.permute.xlu0 %416
  %420 = vset.pattern.permute.xlu0 0
  %421 = vperm.xlu0 %420, %v411
  %v422 = vpop.permute.xlu0 %421
  %425 = vset.pattern.permute.xlu0 0
  %426 = vperm.xlu0 %425, %v412
  %v427 = vpop.permute.xlu0 %426
  %430 = vset.pattern.permute.xlu0 0
  %431 = vperm.xlu0 %430, %v413
  %v432 = vpop.permute.xlu0 %431
  %v438 = vunpack.c.l.b16 %v406
  %v439 = vunpack.c.l.b16 %v407
  %v440 = vunpack.c.l.b16 %v408
  %v441 = vunpack.c.l.b16 %v409
  %v442 = vpack.c.b16 %v439, %v438
  %v443 = vpack.c.b16 %v441, %v440
  %vm444 = vcmask 146432
  %v446 = vsel %vm444, %v442, 0
  %v449 = vsel %vm444, %v443, 0
  %v452 = vsel %vm303, %v297, 0
  %v455 = vsel %vm303, %v298, 0
  %v458 = vsel %vm303, %v299, 0
  %v461 = vsel %vm303, %v300, 0
  %v464 = vsel %vm303, %v301, 0
  %v467 = vsel %vm303, %v302, 0
  %469 = vmatprep.subr.bf16.mxu0 %v392
  %470 = vmatpush1.bf16.msra.mxu0 %v389
  %471 = vmatprep.subr.bf16.mxu0 %v455
  %472 = vmatpush1.bf16.msra.mxu0 %v452
  %473 = vmatprep.subr.bf16.mxu0 0
  %474 = vmatpush1.bf16.msra.mxu0 0
  %475 = vmatprep.subr.bf16.mxu0 0
  %476 = vmatpush1.bf16.msra.mxu0 0
  %477 = vmatprep.subr.bf16.mxu0 0
  %478 = vmatpush1.bf16.msra.mxu0 0
  %479 = vmatprep.subr.bf16.mxu0 0
  %480 = vmatpush1.bf16.msra.mxu0 0
  %481 = vmatprep.subr.bf16.mxu0 0
  %482 = vmatpush1.bf16.msra.mxu0 0
  %483 = vmatprep.subr.bf16.mxu0 0
  %484 = vmatpush1.bf16.msra.mxu0 0
  %485 = vmatprep.subr.bf16.mxu0 0
  %486 = vmatpush1.bf16.msra.mxu0 0
  %487 = vmatprep.subr.bf16.mxu0 0
  %488 = vmatpush1.bf16.msra.mxu0 0
  %489 = vmatprep.subr.bf16.mxu0 0
  %490 = vmatpush1.bf16.msra.mxu0 0
  %491 = vmatprep.subr.bf16.mxu0 0
  %492 = vmatpush1.bf16.msra.mxu0 0
  %493 = vmatprep.subr.bf16.mxu0 0
  %494 = vmatpush1.bf16.msra.mxu0 0
  %495 = vmatprep.subr.bf16.mxu0 0
  %496 = vmatpush1.bf16.msra.mxu0 0
  %497 = vmatprep.subr.bf16.mxu0 0
  %498 = vmatpush1.bf16.msra.mxu0 0
  %499 = vmatprep.subr.bf16.mxu0 0
  %500 = vmatpush1.bf16.msra.mxu0 0
  %501 = vmatprep.mubr.bf16.mxu0 0
  %502 = vmatmul.mubr.bf16.gmra.mrb[0].mxu0 %v446
  %v503 = vpop.f32.mrb[0].mxu0
  %v504 = vadd.f32 %v417, %v503
  %v505 = vpop.f32.mrb[0].mxu0
  %v506 = vadd.f32 %v417, %v505
  %v507 = vpop.f32.mrb[0].mxu0
  %v508 = vadd.f32 %v422, %v507
  %v509 = vpop.f32.mrb[0].mxu0
  %v510 = vadd.f32 %v422, %v509
  %511 = vmatprep.mubr.bf16.mxu0 0
  %512 = vmatmul.mubr.bf16.gmra.mrb[0].mxu0 %v449
  %v513 = vpop.f32.mrb[0].mxu0
  %v514 = vadd.f32 %v427, %v513
  %v515 = vpop.f32.mrb[0].mxu0
  %v516 = vadd.f32 %v427, %v515
  %v517 = vpop.f32.mrb[0].mxu0
  %v518 = vadd.f32 %v432, %v517
  %v519 = vpop.f32.mrb[0].mxu0
  %v520 = vadd.f32 %v432, %v519
  %521 = vdwg.mxu0
  %522 = vmatprep.subr.bf16.mxu0 %v398
  %523 = vmatpush1.bf16.msra.mxu0 %v395
  %524 = vmatprep.subr.bf16.mxu0 %v461
  %525 = vmatpush1.bf16.msra.mxu0 %v458
  %526 = vmatprep.subr.bf16.mxu0 0
  %527 = vmatpush1.bf16.msra.mxu0 0
  %528 = vmatprep.subr.bf16.mxu0 0
  %529 = vmatpush1.bf16.msra.mxu0 0
  %530 = vmatprep.subr.bf16.mxu0 0
  %531 = vmatpush1.bf16.msra.mxu0 0
  %532 = vmatprep.subr.bf16.mxu0 0
  %533 = vmatpush1.bf16.msra.mxu0 0
  %534 = vmatprep.subr.bf16.mxu0 0
  %535 = vmatpush1.bf16.msra.mxu0 0
  %536 = vmatprep.subr.bf16.mxu0 0
  %537 = vmatpush1.bf16.msra.mxu0 0
  %538 = vmatprep.subr.bf16.mxu0 0
  %539 = vmatpush1.bf16.msra.mxu0 0
  %540 = vmatprep.subr.bf16.mxu0 0
  %541 = vmatpush1.bf16.msra.mxu0 0
  %542 = vmatprep.subr.bf16.mxu0 0
  %543 = vmatpush1.bf16.msra.mxu0 0
  %544 = vmatprep.subr.bf16.mxu0 0
  %545 = vmatpush1.bf16.msra.mxu0 0
  %546 = vmatprep.subr.bf16.mxu0 0
  %547 = vmatpush1.bf16.msra.mxu0 0
  %548 = vmatprep.subr.bf16.mxu0 0
  %549 = vmatpush1.bf16.msra.mxu0 0
  %550 = vmatprep.subr.bf16.mxu0 0
  %551 = vmatpush1.bf16.msra.mxu0 0
  %552 = vmatprep.subr.bf16.mxu0 0
  %553 = vmatpush1.bf16.msra.mxu0 0
  %554 = vmatprep.mubr.bf16.mxu0 0
  %555 = vmatmul.mubr.bf16.gmra.mrb[0].mxu0 %v446
  %v556 = vpop.f32.mrb[0].mxu0
  %v557 = vadd.f32 %v417, %v556
  %v558 = vpop.f32.mrb[0].mxu0
  %v559 = vadd.f32 %v417, %v558
  %v560 = vpop.f32.mrb[0].mxu0
  %v561 = vadd.f32 %v422, %v560
  %v562 = vpop.f32.mrb[0].mxu0
  %v563 = vadd.f32 %v422, %v562
  %564 = vmatprep.mubr.bf16.mxu0 0
  %565 = vmatmul.mubr.bf16.gmra.mrb[0].mxu0 %v449
  %v566 = vpop.f32.mrb[0].mxu0
  %v567 = vadd.f32 %v427, %v566
  %v568 = vpop.f32.mrb[0].mxu0
  %v569 = vadd.f32 %v427, %v568
  %v570 = vpop.f32.mrb[0].mxu0
  %v571 = vadd.f32 %v432, %v570
  %v572 = vpop.f32.mrb[0].mxu0
  %v573 = vadd.f32 %v432, %v572
  %574 = vdwg.mxu0
  %575 = vmatprep.subr.bf16.mxu0 %v404
  %576 = vmatpush1.bf16.msra.mxu0 %v401
  %577 = vmatprep.subr.bf16.mxu0 %v467
  %578 = vmatpush1.bf16.msra.mxu0 %v464
  %579 = vmatprep.subr.bf16.mxu0 0
  %580 = vmatpush1.bf16.msra.mxu0 0
  %581 = vmatprep.subr.bf16.mxu0 0
  %582 = vmatpush1.bf16.msra.mxu0 0
  %583 = vmatprep.subr.bf16.mxu0 0
  %584 = vmatpush1.bf16.msra.mxu0 0
  %585 = vmatprep.subr.bf16.mxu0 0
  %586 = vmatpush1.bf16.msra.mxu0 0
  %587 = vmatprep.subr.bf16.mxu0 0
  %588 = vmatpush1.bf16.msra.mxu0 0
  %589 = vmatprep.subr.bf16.mxu0 0
  %590 = vmatpush1.bf16.msra.mxu0 0
  %591 = vmatprep.subr.bf16.mxu0 0
  %592 = vmatpush1.bf16.msra.mxu0 0
  %593 = vmatprep.subr.bf16.mxu0 0
  %594 = vmatpush1.bf16.msra.mxu0 0
  %595 = vmatprep.subr.bf16.mxu0 0
  %596 = vmatpush1.bf16.msra.mxu0 0
  %597 = vmatprep.subr.bf16.mxu0 0
  %598 = vmatpush1.bf16.msra.mxu0 0
  %599 = vmatprep.subr.bf16.mxu0 0
  %600 = vmatpush1.bf16.msra.mxu0 0
  %601 = vmatprep.subr.bf16.mxu0 0
  %602 = vmatpush1.bf16.msra.mxu0 0
  %603 = vmatprep.subr.bf16.mxu0 0
  %604 = vmatpush1.bf16.msra.mxu0 0
  %605 = vmatprep.subr.bf16.mxu0 0
  %606 = vmatpush1.bf16.msra.mxu0 0
  %607 = vmatprep.mubr.bf16.mxu0 0
  %608 = vmatmul.mubr.bf16.gmra.mrb[0].mxu0 %v446
  %v609 = vpop.f32.mrb[0].mxu0
  %v610 = vadd.f32 %v417, %v609
  %v611 = vpop.f32.mrb[0].mxu0
  %v612 = vadd.f32 %v417, %v611
  %v613 = vpop.f32.mrb[0].mxu0
  %v614 = vadd.f32 %v422, %v613
  %v615 = vpop.f32.mrb[0].mxu0
  %v616 = vadd.f32 %v422, %v615
  %617 = vmatprep.mubr.bf16.mxu0 0
  %618 = vmatmul.mubr.bf16.gmra.mrb[0].mxu0 %v449
  %v619 = vpop.f32.mrb[0].mxu0
  %v620 = vadd.f32 %v427, %v619
  %v621 = vpop.f32.mrb[0].mxu0
  %v622 = vadd.f32 %v427, %v621
  %v623 = vpop.f32.mrb[0].mxu0
  %v624 = vadd.f32 %v432, %v623
  %v625 = vpop.f32.mrb[0].mxu0
  %v626 = vadd.f32 %v432, %v625
  %627 = vdwg.mxu0
  %v628 = vmax.f32 %v504, 0.0
  %v629 = vmax.f32 %v506, 0.0
  %v630 = vmax.f32 %v557, 0.0
  %v631 = vmax.f32 %v559, 0.0
  %v632 = vmax.f32 %v610, 0.0
  %v633 = vmax.f32 %v612, 0.0
  %v634 = vmax.f32 %v508, 0.0
  %v635 = vmax.f32 %v510, 0.0
  %v636 = vmax.f32 %v561, 0.0
  %v637 = vmax.f32 %v563, 0.0
  %v638 = vmax.f32 %v614, 0.0
  %v639 = vmax.f32 %v616, 0.0
  %v640 = vmax.f32 %v514, 0.0
  %v641 = vmax.f32 %v516, 0.0
  %v642 = vmax.f32 %v567, 0.0
  %v643 = vmax.f32 %v569, 0.0
  %v644 = vmax.f32 %v620, 0.0
  %v645 = vmax.f32 %v622, 0.0
  %v646 = vmax.f32 %v518, 0.0
  %v647 = vmax.f32 %v520, 0.0
  %v648 = vmax.f32 %v571, 0.0
  %v649 = vmax.f32 %v573, 0.0
  %v650 = vmax.f32 %v624, 0.0
  %v651 = vmax.f32 %v626, 0.0
  %v652 = vld [vmem:[%s5] sm:$0x7]
  %v654 = vlaneseq
  %v655 = vshrl.u32 %v654, 7
  %v656 = vsub.s32 0, %v655
  %v657 = vrot.slane %v652, %v656
  %v658 = vlaneseq
  %v659 = vshrl.u32 %v658, 7
  %v660 = vsub.s32 1, %v659
  %v661 = vrot.slane %v652, %v660
  %v662 = vlaneseq
  %v663 = vshrl.u32 %v662, 7
  %v664 = vsub.s32 2, %v663
  %v665 = vrot.slane %v652, %v664
  %v669 = vmul.f32 %v628, %v657
  %v670 = vmul.f32 %v629, %v661
  %v671 = vmul.f32 %v630, %v665
  %v672 = vmul.f32 %v634, %v657
  %v673 = vmul.f32 %v635, %v661
  %v674 = vmul.f32 %v636, %v665
  %v675 = vmul.f32 %v640, %v657
  %v676 = vmul.f32 %v641, %v661
  %v677 = vmul.f32 %v642, %v665
  %v678 = vmul.f32 %v646, %v657
  %v679 = vmul.f32 %v647, %v661
  %v680 = vmul.f32 %v648, %v665
  %v681 = vadd.f32 %v669, %v670
  %v682 = vadd.f32 %v681, %v671
  %683 = vadd.xlane.f32.xlu0 %v682
  %v684 = vpop.xlane.xlu0 %683
  %v685 = vadd.f32 %v672, %v673
  %v686 = vadd.f32 %v685, %v674
  %687 = vadd.xlane.f32.xlu0 %v686
  %v688 = vpop.xlane.xlu0 %687
  %v689 = vadd.f32 %v675, %v676
  %v690 = vadd.f32 %v689, %v677
  %691 = vadd.xlane.f32.xlu0 %v690
  %v692 = vpop.xlane.xlu0 %691
  %v693 = vadd.f32 %v678, %v679
  %v694 = vadd.f32 %v693, %v680
  %695 = vadd.xlane.f32.xlu0 %v694
  %v696 = vpop.xlane.xlu0 %695
  %v697 = vmul.f32 %v631, %v657
  %v698 = vmul.f32 %v632, %v661
  %v699 = vmul.f32 %v633, %v665
  %v700 = vmul.f32 %v637, %v657
  %v701 = vmul.f32 %v638, %v661
  %v702 = vmul.f32 %v639, %v665
  %v703 = vmul.f32 %v643, %v657
  %v704 = vmul.f32 %v644, %v661
  %v705 = vmul.f32 %v645, %v665
  %v706 = vmul.f32 %v649, %v657
  %v707 = vmul.f32 %v650, %v661
  %v708 = vmul.f32 %v651, %v665
  %v709 = vadd.f32 %v697, %v698
  %v710 = vadd.f32 %v709, %v699
  %711 = vadd.xlane.f32.xlu0 %v710
  %v712 = vpop.xlane.xlu0 %711
  %v713 = vadd.f32 %v700, %v701
  %v714 = vadd.f32 %v713, %v702
  %715 = vadd.xlane.f32.xlu0 %v714
  %v716 = vpop.xlane.xlu0 %715
  %v717 = vadd.f32 %v703, %v704
  %v718 = vadd.f32 %v717, %v705
  %719 = vadd.xlane.f32.xlu0 %v718
  %v720 = vpop.xlane.xlu0 %719
  %v721 = vadd.f32 %v706, %v707
  %v722 = vadd.f32 %v721, %v708
  %723 = vadd.xlane.f32.xlu0 %v722
  %v724 = vpop.xlane.xlu0 %723
  %vm725 = vcmask 7168
  %v726 = vsel %vm725, %v684, %v712
  %v727 = vsel %vm725, %v688, %v716
  %v728 = vsel %vm725, %v692, %v720
  %v729 = vsel %vm725, %v696, %v724
  %v730 = vld [vmem:[%s3] sm:$0xff]
  %v731 = vld [vmem:[%s4] sm:$0xff]
  %733 = vset.pattern.permute.xlu0 0
  %734 = vperm.xlu0 %733, %v731
  %v735 = vpop.permute.xlu0 %734
  %vm737 = vcmask 261120
  %v739 = vsel %vm737, %v730, 0
  %741 = vmatprep.subr.mxu0 0.0
  %742 = vmatpush1.msra.mxu0 %v726
  %743 = vmatprep.subr.mxu0 0.0
  %744 = vmatpush1.msra.mxu0 %v727
  %745 = vmatprep.subr.mxu0 0.0
  %746 = vmatpush1.msra.mxu0 %v728
  %747 = vmatprep.subr.mxu0 0.0
  %748 = vmatpush1.msra.mxu0 %v729
  %749 = vmatprep.subr.mxu0 0.0
  %750 = vmatpush1.msra.mxu0 0.0
  %751 = vmatprep.subr.mxu0 0.0
  %752 = vmatpush1.msra.mxu0 0.0
  %753 = vmatprep.subr.mxu0 0.0
  %754 = vmatpush1.msra.mxu0 0.0
  %755 = vmatprep.subr.mxu0 0.0
  %756 = vmatpush1.msra.mxu0 0.0
  %757 = vmatprep.subr.mxu0 0.0
  %758 = vmatpush1.msra.mxu0 0.0
  %759 = vmatprep.subr.mxu0 0.0
  %760 = vmatpush1.msra.mxu0 0.0
  %761 = vmatprep.subr.mxu0 0.0
  %762 = vmatpush1.msra.mxu0 0.0
  %763 = vmatprep.subr.mxu0 0.0
  %764 = vmatpush1.msra.mxu0 0.0
  %765 = vmatprep.subr.mxu0 0.0
  %766 = vmatpush1.msra.mxu0 0.0
  %767 = vmatprep.subr.mxu0 0.0
  %768 = vmatpush1.msra.mxu0 0.0
  %769 = vmatprep.subr.mxu0 0.0
  %770 = vmatpush1.msra.mxu0 0.0
  %771 = vmatprep.subr.mxu0 0.0
  %772 = vmatpush1.msra.mxu0 0.0
  %773 = vmatprep.subr.mxu0 0.0
  %774 = vmatpush1.msra.mxu0 0.0
  %775 = vmatprep.subr.mxu0 0.0
  %776 = vmatpush1.msra.mxu0 0.0
  %777 = vmatprep.subr.mxu0 0.0
  %778 = vmatpush1.msra.mxu0 0.0
  %779 = vmatprep.subr.mxu0 0.0
  %780 = vmatpush1.msra.mxu0 0.0
  %781 = vmatprep.subr.mxu0 0.0
  %782 = vmatpush1.msra.mxu0 0.0
  %783 = vmatprep.subr.mxu0 0.0
  %784 = vmatpush1.msra.mxu0 0.0
  %785 = vmatprep.subr.mxu0 0.0
  %786 = vmatpush1.msra.mxu0 0.0
  %787 = vmatprep.subr.mxu0 0.0
  %788 = vmatpush1.msra.mxu0 0.0
  %789 = vmatprep.subr.mxu0 0.0
  %790 = vmatpush1.msra.mxu0 0.0
  %791 = vmatprep.subr.mxu0 0.0
  %792 = vmatpush1.msra.mxu0 0.0
  %793 = vmatprep.subr.mxu0 0.0
  %794 = vmatpush1.msra.mxu0 0.0
  %795 = vmatprep.subr.mxu0 0.0
  %796 = vmatpush1.msra.mxu0 0.0
  %797 = vmatprep.subr.mxu0 0.0
  %798 = vmatpush1.msra.mxu0 0.0
  %799 = vmatprep.subr.mxu0 0.0
  %800 = vmatpush1.msra.mxu0 0.0
  %801 = vmatprep.subr.mxu0 0.0
  %802 = vmatpush1.msra.mxu0 0.0
  %803 = vmatprep.subr.mxu0 0.0
  %804 = vmatpush1.msra.mxu0 0.0
  %805 = vmatprep.mubr.f32.mxu0 0.0
  %806 = vmatmul.mubr.f32.gmra.mrb[0].mxu0 %v739
  %v807 = vpop.f32.mrb[0].mxu0
  %v808 = vadd.f32 %v735, %v807
  %v809 = vpop.f32.mrb[0].mxu0
  %810 = vdwg.mxu0
  %vm811 = vcmask 15360
  %812 = vst.msk [vmem:[%s6] sm:$0xff] %vm811, %v808
  // Predicated region
  $region26: #{single_modal_forward.1} parent=0 // pred_check
    _
  $region27: #{single_modal_forward.1} parent=0 // pred_check_branch
    %814 = sbr.rel (0) target = $region29
  $region28: #{single_modal_forward.1} parent=0 // pred_region
    _
  $region29: #{single_modal_forward.1} parent=0 // pred_fallthru
    _
  // Predicated region
  $region30: #{single_modal_forward.1} parent=0 // pred_check
    _
  $region31: #{single_modal_forward.1} parent=0 // pred_check_branch
    %816 = sbr.rel (0) target = $region33
  $region32: #{single_modal_forward.1} parent=0 // pred_region
    _
  $region33: #{single_modal_forward.1} parent=0 // pred_fallthru
    _

</llo_original>
